<compile_context>
chip_gen: v5e
topology: v5e:2x2
jax: 0.10.0
libtpu: 0.0.40
codegen_flags: <defaults>
</compile_context>

<pallas_src>
from functools import partial, reduce
from operator import __add__

import jax
import jax.numpy as jnp
from jax.experimental import pallas as pl
from jax.experimental.pallas import tpu as pltpu


def _conv_relu_stats_kernel(x_ref, w_ref, y_ref, stats_ref, *, KF):
    """Conv (KF folded matmuls) + ReLU + per-tile BN partial sums.

    x_ref    : (KF, TM, K)  bf16  lhs slabs (one per folded tap group)
    w_ref    : (KF, K, NL)  bf16  folded weights (grid-invariant, resident)
    y_ref    : (TM, NL)     bf16  conv+ReLU activations, lane-dense packed
    stats_ref: (8, NL)      f32   rows 0/1 = [sum, sum of squares], rest zero
    """
    # KF MXU matmuls accumulated in f32.
    # TODO(synk): on v7x the MRB supports addressed in-place MXU accumulation;
    # verify this value chain lowers to it rather than KF-1 VALU adds.
    acc = jnp.dot(x_ref[0], w_ref[0], preferred_element_type=jnp.float32)
    for k in range(1, KF):                                   # static unroll
        acc = acc + jnp.dot(x_ref[k], w_ref[k],
                            preferred_element_type=jnp.float32)

    acc = jnp.maximum(acc, 0.0)                 # ReLU (before BN, as in module)

    y_ref[...] = acc.astype(y_ref.dtype)        # lane-dense bf16 store

    # BN partials per packed output column, computed from the f32 accumulator
    # (not the bf16 store). Padded to 8 sublane rows -> one unmasked store.
    s1 = jnp.sum(acc, axis=0, keepdims=True)
    s2 = jnp.sum(acc * acc, axis=0, keepdims=True)
    pad = jnp.zeros((6, s1.shape[1]), jnp.float32)
    stats_ref[...] = jnp.concatenate([s1, s2, pad], axis=0)


def basic_conv2d(x_nchw, w_oihw, gamma, beta, kernel_size, eps=1e-5,
                 tile_m=None, fold_mode="auto"):
    """Forward pass of BasicConv2d.

    x_nchw: (N, Cin, H, W); w_oihw: (Cout, Cin, KH, KW); gamma/beta: (Cout,).
    Returns (N, Cout, H, W) in the input dtype.
    """
    KH, KW = kernel_size
    N, Cin, H, W = x_nchw.shape
    Cout = w_oihw.shape[0]

    # Identical "same"-padding arithmetic to the PyTorch module
    # (ZeroPad2d((w_left, w_right, h_top, h_bottom))).
    # TODO(synk): only odd kernel sizes are exercised in the test; even-kernel
    # asymmetric splits follow the same formula but are not re-validated here.
    conv_padding = reduce(
        __add__,
        [(k // 2 + (k - 2 * (k // 2)) - 1, k // 2) for k in kernel_size[::-1]])
    pw_l, pw_r, ph_t, ph_b = conv_padding

    # ---- glue: layout, padding, bf16 cast (cheap next to the conv) ----------
    x_nhwc = jnp.transpose(x_nchw, (0, 2, 3, 1))
    xp = jnp.pad(x_nhwc, ((0, 0), (ph_t, ph_b), (pw_l, pw_r), (0, 0)))
    xp = xp.astype(jnp.bfloat16)
    Hp, Wp = xp.shape[1], xp.shape[2]
    Ho, Wo = Hp - KH + 1, Wp - KW + 1                   # == H, W ("same" conv)

    w_hwio = jnp.transpose(w_oihw, (2, 3, 1, 0)).astype(jnp.bfloat16)  # (KH,KW,Cin,Cout)

    # Pick the lhs/rhs folding. The width-folded (Toeplitz) weight gives a
    # lane-dense (w, cout) packed output but scales as KH*Wp*Cin*Wo*Cout and
    # wastes ~Wp/KW of the MACs on structural zeros, so it is only used while
    # it stays small; otherwise fall back to a plain im2col patch matmul.
    toep_bytes = KH * Wp * Cin * Wo * Cout * 2          # bf16
    if fold_mode == "auto":
        fold_mode = "toeplitz" if toep_bytes <= 4 * 1024 * 1024 else "im2col"

    if fold_mode == "toeplitz":
        # lhs[kh, n*Ho + r, :] = padded row (r + kh) of image n, width packed
        # with Cin.  This "H-unfold" replicates the (small) input KH times in
        # HBM, which is what lets batch rows be folded into full-height MXU
        # tiles even when Ho is tiny.
        xp2 = xp.reshape(N, Hp, Wp * Cin)
        lhs = jnp.stack(
            [xp2[:, kh:kh + Ho, :].reshape(N * Ho, Wp * Cin) for kh in range(KH)],
            axis=0)                                       # (KH, N*Ho, Wp*Cin)
        # Width-folded weights:
        #   rhs[kh, w'*Cin + ci, w*Cout + co] = w[co, ci, kh, w'-w], 0 <= w'-w < KW
        wflat = w_hwio.reshape(KH, KW * Cin, Cout)
        base = jnp.pad(wflat, ((0, 0), (0, (Wp - KW) * Cin), (0, 0)))
        toep = jax.vmap(lambda s: jnp.roll(base, s, axis=1))(jnp.arange(Wo) * Cin)
        rhs = jnp.transpose(toep, (1, 2, 0, 3)).reshape(KH, Wp * Cin, Wo * Cout)
        KF, M, K, NL = KH, N * Ho, Wp * Cin, Wo * Cout
    else:
        # im2col: patches (N*Ho*Wo, KH*KW*Cin) x weight (KH*KW*Cin, Cout).
        cols = [xp[:, kh:kh + Ho, kw:kw + Wo, :]
                for kh in range(KH) for kw in range(KW)]   # each (N,Ho,Wo,Cin)
        patches = jnp.stack(cols, axis=3)                  # (N,Ho,Wo,KH*KW,Cin)
        lhs = patches.reshape(1, N * Ho * Wo, KH * KW * Cin)
        rhs = w_hwio.reshape(1, KH * KW * Cin, Cout)
        KF, M, K, NL = 1, N * Ho * Wo, KH * KW * Cin, Cout

    # ---- M tile size: as large as fits a conservative VMEM budget ----------
    if tile_m is None:
        # bytes per tile row: double-buffered bf16 lhs + bf16 y + f32 acc
        row_bytes = 2 * 2 * (KF * K + NL) + 4 * NL
        cap = max(8, min(512, (24 * 1024 * 1024) // max(row_bytes, 1)))
        tile_m = M
        cand = 8
        while cand <= min(M, cap):
            if M % cand == 0:
                tile_m = cand                  # largest multiple-of-8 divisor
            cand += 8
    TM = int(tile_m)
    assert M % TM == 0, "tile_m must divide the folded row count"
    GT = M // TM

    # Per-generation scoped-VMEM budget (v5e/v6e: 128 MiB phys, v7x: 64 MiB).
    try:
        phys = int(pltpu.get_tpu_info().vmem_capacity_bytes)
        vmem_limit = int(min(phys * 3 // 4, 100 * 1024 * 1024))
    except Exception:
        vmem_limit = 48 * 1024 * 1024
    cparams = pltpu.CompilerParams(
        dimension_semantics=("parallel",),     # independent row tiles
        vmem_limit_bytes=vmem_limit,
    )

    # ---- Pallas pass: conv + ReLU + BN partial sums -------------------------
    kernel = partial(_conv_relu_stats_kernel, KF=KF)
    y_lin, partials = pl.pallas_call(
        kernel,
        out_shape=(jax.ShapeDtypeStruct((M, NL), jnp.bfloat16),
                   jax.ShapeDtypeStruct((GT, 8, NL), jnp.float32)),
        grid_spec=pltpu.PrefetchScalarGridSpec(
            num_scalar_prefetch=0,
            grid=(GT,),
            in_specs=[
                pl.BlockSpec((KF, TM, K), lambda i: (0, i, 0)),
                # Grid-invariant weight: constant block index -> fetched once.
                # TODO(synk): on v7x, pipeline_mode=pl.Buffered(1) here would
                # drop the second pipeline buffer and halve its VMEM footprint.
                pl.BlockSpec((KF, K, NL), lambda i: (0, 0, 0)),
            ],
            out_specs=[
                pl.BlockSpec((TM, NL), lambda i: (i, 0)),
                pl.BlockSpec((pl.Squeezed(), 8, NL), lambda i: (i, 0, 0)),
            ],
        ),
        compiler_params=cparams,
    )(lhs, rhs)

    # ---- tiny glue: global training-mode BN statistics (biased) -------------
    cnt = jnp.float32(N * Ho * Wo)
    col_sums = jnp.sum(partials, axis=0)                   # (8, NL)
    s1 = col_sums[0].reshape(-1, Cout).sum(axis=0)         # (Cout,)
    s2 = col_sums[1].reshape(-1, Cout).sum(axis=0)
    mean = s1 / cnt
    # TODO(synk): E[x^2]-E[x]^2 in f32 can lose precision for very large
    # N*H*W; a Welford-style combine of per-tile moments would be more robust.
    var = jnp.maximum(s2 / cnt - mean * mean, 0.0)
    inv = jax.lax.rsqrt(var + eps)
    scale = gamma.astype(jnp.float32) * inv
    shift = beta.astype(jnp.float32) - mean * scale

    # ---- BN apply fused (by XLA) with the unpack + NHWC->NCHW transpose -----
    y_nhwc = y_lin.reshape(N, Ho, Wo, Cout).astype(jnp.float32)
    out_nhwc = y_nhwc * scale[None, None, None, :] + shift[None, None, None, :]
    return jnp.transpose(out_nhwc, (0, 3, 1, 2)).astype(x_nchw.dtype)


if __name__ == "__main__":
    key = jax.random.PRNGKey(0)
    k_x, k_w = jax.random.split(key)

    # Small shapes consistent with the module: NCHW input, 3x3 "same" conv.
    N, Cin, H, W = 2, 4, 16, 16
    Cout = 8
    kernel_size = (3, 3)

    x = jax.random.normal(k_x, (N, Cin, H, W), dtype=jnp.float32)
    w = 0.1 * jax.random.normal(k_w, (Cout, Cin) + kernel_size, dtype=jnp.float32)
    gamma = jnp.ones((Cout,), jnp.float32)   # BatchNorm2d default affine init
    beta = jnp.zeros((Cout,), jnp.float32)

    # Pure-JAX reference with the same training-mode BN semantics and the same
    # (intentional) mixed precision as the kernel: bf16 conv operands, f32
    # accumulation/statistics.  Padding (1,1)/(1,1) is the module's ZeroPad2d
    # result for a 3x3 kernel.
    xr = x.astype(jnp.bfloat16).astype(jnp.float32)
    wr = w.astype(jnp.bfloat16).astype(jnp.float32)
    ref = jax.lax.conv_general_dilated(
        xr, wr, window_strides=(1, 1), padding=((1, 1), (1, 1)),
        dimension_numbers=("NCHW", "OIHW", "NCHW"),
        precision=jax.lax.Precision.HIGHEST)
    ref = jnp.maximum(ref, 0.0)
    m = jnp.mean(ref, axis=(0, 2, 3), keepdims=True)
    v = jnp.var(ref, axis=(0, 2, 3), keepdims=True)
    ref = (ref - m) * jax.lax.rsqrt(v + 1e-5)
    ref = ref * gamma.reshape(1, -1, 1, 1) + beta.reshape(1, -1, 1, 1)

    # Exercise both folding paths (width-folded Toeplitz and im2col fallback).
    for mode in ("toeplitz", "im2col"):
        fwd = jax.jit(partial(basic_conv2d, kernel_size=kernel_size,
                              fold_mode=mode))
        out = fwd(x, w, gamma, beta)
        jax.block_until_ready(out)
        assert out.shape == (N, Cout, H, W)
        err = float(jnp.max(jnp.abs(out - ref)))
        assert err < 5e-2, f"{mode}: max abs error vs reference too large: {err}"

    print("KERNEL_OK")
</pallas_src>

<mosaic_0001>
module attributes {stable_mosaic.version = 11 : i64} {
  func.func @_conv_relu_stats_kernel(%arg0: i32, %arg1: memref<3x32x72xbf16, #tpu.memory_space<vmem>>, %arg2: memref<3x72x128xbf16, #tpu.memory_space<vmem>>, %arg3: memref<32x128xbf16, #tpu.memory_space<vmem>>, %arg4: memref<1x8x128xf32, #tpu.memory_space<vmem>>) attributes {dimension_semantics = [#tpu.dimension_semantics<parallel>], iteration_bounds = array<i64: 1>, scalar_prefetch = 0 : i64, scratch_operands = 0 : i64, tpu.core_type = #tpu.core_type<tc>, window_params = [{transform_indices = @transform_0, window_bounds = array<i64: 3, 32, 72>}, {pipeline_mode = #tpu.pipeline_mode<synchronous>, transform_indices = @transform_1, window_bounds = array<i64: 3, 72, 128>}, {transform_indices = @transform_2, window_bounds = array<i64: 32, 128>}, {transform_indices = @transform_3, window_bounds = array<i64: 1, 8, 128>}]} {
    %c0 = arith.constant 0 : index
    %c0_0 = arith.constant 0 : index
    %c0_1 = arith.constant 0 : index
    %0 = vector.load %arg1[%c0, %c0_0, %c0_1] : memref<3x32x72xbf16, #tpu.memory_space<vmem>>, vector<1x32x72xbf16>
    %1 = vector.shape_cast %0 : vector<1x32x72xbf16> to vector<32x72xbf16>
    %c0_2 = arith.constant 0 : index
    %c0_3 = arith.constant 0 : index
    %c0_4 = arith.constant 0 : index
    %2 = vector.load %arg2[%c0_2, %c0_3, %c0_4] : memref<3x72x128xbf16, #tpu.memory_space<vmem>>, vector<1x72x128xbf16>
    %3 = vector.shape_cast %2 : vector<1x72x128xbf16> to vector<72x128xbf16>
    %cst = arith.constant dense<0.000000e+00> : vector<32x128xf32>
    %4 = tpu.matmul %1, %3, %cst {dimension_numbers = #tpu.dot_dimension_numbers<[1], [0], [0], [1], [0, 0, 1, 1], [], []>} : vector<32x72xbf16>, vector<72x128xbf16>, vector<32x128xf32> -> vector<32x128xf32>
    %c1 = arith.constant 1 : index
    %c0_5 = arith.constant 0 : index
    %c0_6 = arith.constant 0 : index
    %5 = vector.load %arg1[%c1, %c0_5, %c0_6] : memref<3x32x72xbf16, #tpu.memory_space<vmem>>, vector<1x32x72xbf16>
    %6 = vector.shape_cast %5 : vector<1x32x72xbf16> to vector<32x72xbf16>
    %c1_7 = arith.constant 1 : index
    %c0_8 = arith.constant 0 : index
    %c0_9 = arith.constant 0 : index
    %7 = vector.load %arg2[%c1_7, %c0_8, %c0_9] : memref<3x72x128xbf16, #tpu.memory_space<vmem>>, vector<1x72x128xbf16>
    %8 = vector.shape_cast %7 : vector<1x72x128xbf16> to vector<72x128xbf16>
    %cst_10 = arith.constant dense<0.000000e+00> : vector<32x128xf32>
    %9 = tpu.matmul %6, %8, %cst_10 {dimension_numbers = #tpu.dot_dimension_numbers<[1], [0], [0], [1], [0, 0, 1, 1], [], []>} : vector<32x72xbf16>, vector<72x128xbf16>, vector<32x128xf32> -> vector<32x128xf32>
    %10 = arith.addf %4, %9 : vector<32x128xf32>
    %c2 = arith.constant 2 : index
    %c0_11 = arith.constant 0 : index
    %c0_12 = arith.constant 0 : index
    %11 = vector.load %arg1[%c2, %c0_11, %c0_12] : memref<3x32x72xbf16, #tpu.memory_space<vmem>>, vector<1x32x72xbf16>
    %12 = vector.shape_cast %11 : vector<1x32x72xbf16> to vector<32x72xbf16>
    %c2_13 = arith.constant 2 : index
    %c0_14 = arith.constant 0 : index
    %c0_15 = arith.constant 0 : index
    %13 = vector.load %arg2[%c2_13, %c0_14, %c0_15] : memref<3x72x128xbf16, #tpu.memory_space<vmem>>, vector<1x72x128xbf16>
    %14 = vector.shape_cast %13 : vector<1x72x128xbf16> to vector<72x128xbf16>
    %cst_16 = arith.constant dense<0.000000e+00> : vector<32x128xf32>
    %15 = tpu.matmul %12, %14, %cst_16 {dimension_numbers = #tpu.dot_dimension_numbers<[1], [0], [0], [1], [0, 0, 1, 1], [], []>} : vector<32x72xbf16>, vector<72x128xbf16>, vector<32x128xf32> -> vector<32x128xf32>
    %16 = arith.addf %10, %15 : vector<32x128xf32>
    %cst_17 = arith.constant 0.000000e+00 : f32
    %17 = vector.broadcast %cst_17 : f32 to vector<32x128xf32>
    %18 = arith.maximumf %16, %17 : vector<32x128xf32>
    %19 = arith.truncf %18 : vector<32x128xf32> to vector<32x128xbf16>
    %c0_18 = arith.constant 0 : index
    %c0_19 = arith.constant 0 : index
    %20 = vector.load %arg3[%c0_18, %c0_19] : memref<32x128xbf16, #tpu.memory_space<vmem>>, vector<32x128xbf16>
    tpu.vector_store %arg3[%c0_18, %c0_19], %19 {strides = array<i32>} : memref<32x128xbf16, #tpu.memory_space<vmem>>, vector<32x128xbf16>,
    %cst_20 = arith.constant dense<0.000000e+00> : vector<128xf32>
    %21 = vector.multi_reduction <add>, %18, %cst_20 [0] : vector<32x128xf32> to vector<128xf32>
    %22 = vector.shape_cast %21 : vector<128xf32> to vector<1x128xf32>
    %23 = arith.mulf %18, %18 : vector<32x128xf32>
    %cst_21 = arith.constant dense<0.000000e+00> : vector<128xf32>
    %24 = vector.multi_reduction <add>, %23, %cst_21 [0] : vector<32x128xf32> to vector<128xf32>
    %25 = vector.shape_cast %24 : vector<128xf32> to vector<1x128xf32>
    %cst_22 = arith.constant 0.000000e+00 : f32
    %26 = vector.broadcast %cst_22 : f32 to vector<6x128xf32>
    %27 = tpu.concatenate %22, %25, %26 in 0 : vector<1x128xf32>, vector<1x128xf32>, vector<6x128xf32> -> vector<8x128xf32>
    %c0_23 = arith.constant 0 : index
    %c0_24 = arith.constant 0 : index
    %c0_25 = arith.constant 0 : index
    %28 = vector.load %arg4[%c0_23, %c0_24, %c0_25] : memref<1x8x128xf32, #tpu.memory_space<vmem>>, vector<1x8x128xf32>
    %29 = vector.shape_cast %28 : vector<1x8x128xf32> to vector<8x128xf32>
    %30 = vector.shape_cast %27 : vector<8x128xf32> to vector<1x8x128xf32>
    tpu.vector_store %arg4[%c0_23, %c0_24, %c0_25], %30 {strides = array<i32>} : memref<1x8x128xf32, #tpu.memory_space<vmem>>, vector<1x8x128xf32>,
    return
  }
  func.func @transform_0(%arg0: i32) -> (i32, i32, i32) {
    %c0_i32 = arith.constant 0 : i32
    %c0_i32_0 = arith.constant 0 : i32
    %c0_i32_1 = arith.constant 0 : i32
    return %c0_i32, %arg0, %c0_i32_0 : i32, i32, i32
  }
  func.func @transform_1(%arg0: i32) -> (i32, i32, i32) {
    %c0_i32 = arith.constant 0 : i32
    %c0_i32_0 = arith.constant 0 : i32
    %c0_i32_1 = arith.constant 0 : i32
    %c0_i32_2 = arith.constant 0 : i32
    return %c0_i32, %c0_i32_0, %c0_i32_1 : i32, i32, i32
  }
  func.func @transform_2(%arg0: i32) -> (i32, i32) {
    %c0_i32 = arith.constant 0 : i32
    %c0_i32_0 = arith.constant 0 : i32
    return %arg0, %c0_i32 : i32, i32
  }
  func.func @transform_3(%arg0: i32) -> (i32, i32, i32) {
    %c0_i32 = arith.constant 0 : i32
    %c0_i32_0 = arith.constant 0 : i32
    %c0_i32_1 = arith.constant 0 : i32
    return %arg0, %c0_i32, %c0_i32_0 : i32, i32, i32
  }
}

</mosaic_0001>

<llo_original>
// kernel: squeeze.2
$region0: #{squeeze.2}
  %s0 = inlined_call_operand.vmem [shape: f32[128], index: 0, kind: input, shape index: {}]
  %s1 = inlined_call_operand.vmem [shape: f32[16,8], index: 1, kind: output, shape index: {}]
  $region1: #{squeeze.2} parent=0
    #allocation0 [shape = 'u8[4096]{0}', space=vmem, size = 0x1000, scoped, tag = 'scoped mem for input reshape']
    %s3 = ssub.s32 2, 1
    %v4 = vld [vmem:[%s0] sm:%s3]
    %5 = vst [vmem:[#allocation0] sm:%s3] %v4
    %v6 = vld [vmem:[#allocation0] sm:$0x1]
    %vm7 = vcmask 64512
    %8 = vst.msk [vmem:[%s1] sm:$0x1] %vm7, %v6
    %v9 = vld [vmem:[#allocation0] sm:$0x1]
    %10 = vrot.lane.b32.xlu0 %v9, 120
    %v11 = vpop.permute.xlu0 %10
    %vm12 = vcmask 64512
    %s13 = scalar_lea.vmem %s1, 1
    %14 = vst.msk [vmem:[%s13] sm:$0x1] %vm12, %v11
    %v15 = vld [vmem:[#allocation0] sm:$0x1]
    %16 = vrot.lane.b32.xlu0 %v15, 112
    %v17 = vpop.permute.xlu0 %16
    %vm18 = vcmask 64512
    %s19 = scalar_lea.vmem %s1, 2
    %20 = vst.msk [vmem:[%s19] sm:$0x1] %vm18, %v17
    %v21 = vld [vmem:[#allocation0] sm:$0x1]
    %22 = vrot.lane.b32.xlu0 %v21, 104
    %v23 = vpop.permute.xlu0 %22
    %vm24 = vcmask 64512
    %s25 = scalar_lea.vmem %s1, 3
    %26 = vst.msk [vmem:[%s25] sm:$0x1] %vm24, %v23
    %v27 = vld [vmem:[#allocation0] sm:$0x1]
    %28 = vrot.lane.b32.xlu0 %v27, 96
    %v29 = vpop.permute.xlu0 %28
    %vm30 = vcmask 64512
    %s31 = scalar_lea.vmem %s1, 4
    %32 = vst.msk [vmem:[%s31] sm:$0x1] %vm30, %v29
    %v33 = vld [vmem:[#allocation0] sm:$0x1]
    %34 = vrot.lane.b32.xlu0 %v33, 88
    %v35 = vpop.permute.xlu0 %34
    %vm36 = vcmask 64512
    %s37 = scalar_lea.vmem %s1, 5
    %38 = vst.msk [vmem:[%s37] sm:$0x1] %vm36, %v35
    %v39 = vld [vmem:[#allocation0] sm:$0x1]
    %40 = vrot.lane.b32.xlu0 %v39, 80
    %v41 = vpop.permute.xlu0 %40
    %vm42 = vcmask 64512
    %s43 = scalar_lea.vmem %s1, 6
    %44 = vst.msk [vmem:[%s43] sm:$0x1] %vm42, %v41
    %v45 = vld [vmem:[#allocation0] sm:$0x1]
    %46 = vrot.lane.b32.xlu0 %v45, 72
    %v47 = vpop.permute.xlu0 %46
    %vm48 = vcmask 64512
    %s49 = scalar_lea.vmem %s1, 7
    %50 = vst.msk [vmem:[%s49] sm:$0x1] %vm48, %v47
    %v51 = vld [vmem:[#allocation0] sm:$0x1]
    %52 = vrot.lane.b32.xlu0 %v51, 64
    %v53 = vpop.permute.xlu0 %52
    %vm54 = vcmask 64512
    %s55 = scalar_lea.vmem %s1, 8
    %56 = vst.msk [vmem:[%s55] sm:$0x1] %vm54, %v53
    %v57 = vld [vmem:[#allocation0] sm:$0x1]
    %58 = vrot.lane.b32.xlu0 %v57, 56
    %v59 = vpop.permute.xlu0 %58
    %vm60 = vcmask 64512
    %s61 = scalar_lea.vmem %s1, 9
    %62 = vst.msk [vmem:[%s61] sm:$0x1] %vm60, %v59
    %v63 = vld [vmem:[#allocation0] sm:$0x1]
    %64 = vrot.lane.b32.xlu0 %v63, 48
    %v65 = vpop.permute.xlu0 %64
    %vm66 = vcmask 64512
    %s67 = scalar_lea.vmem %s1, 10
    %68 = vst.msk [vmem:[%s67] sm:$0x1] %vm66, %v65
    %v69 = vld [vmem:[#allocation0] sm:$0x1]
    %70 = vrot.lane.b32.xlu0 %v69, 40
    %v71 = vpop.permute.xlu0 %70
    %vm72 = vcmask 64512
    %s73 = scalar_lea.vmem %s1, 11
    %74 = vst.msk [vmem:[%s73] sm:$0x1] %vm72, %v71
    %v75 = vld [vmem:[#allocation0] sm:$0x1]
    %76 = vrot.lane.b32.xlu0 %v75, 32
    %v77 = vpop.permute.xlu0 %76
    %vm78 = vcmask 64512
    %s79 = scalar_lea.vmem %s1, 12
    %80 = vst.msk [vmem:[%s79] sm:$0x1] %vm78, %v77
    %v81 = vld [vmem:[#allocation0] sm:$0x1]
    %82 = vrot.lane.b32.xlu0 %v81, 24
    %v83 = vpop.permute.xlu0 %82
    %vm84 = vcmask 64512
    %s85 = scalar_lea.vmem %s1, 13
    %86 = vst.msk [vmem:[%s85] sm:$0x1] %vm84, %v83
    %v87 = vld [vmem:[#allocation0] sm:$0x1]
    %88 = vrot.lane.b32.xlu0 %v87, 16
    %v89 = vpop.permute.xlu0 %88
    %vm90 = vcmask 64512
    %s91 = scalar_lea.vmem %s1, 14
    %92 = vst.msk [vmem:[%s91] sm:$0x1] %vm90, %v89
    %v93 = vld [vmem:[#allocation0] sm:$0x1]
    %94 = vrot.lane.b32.xlu0 %v93, 8
    %v95 = vpop.permute.xlu0 %94
    %vm96 = vcmask 64512
    %s97 = scalar_lea.vmem %s1, 15
    %98 = vst.msk [vmem:[%s97] sm:$0x1] %vm96, %v95

// kernel: basic_conv2d.1
$region0: #{basic_conv2d.1}
  #allocation0 [shape = 'u32[]', space=smem, size = 0x4, offset = 0x4, fixed_abs, tag = 'smem constant byte address 0x4 - core index']
  #allocation1 [shape = 'u32[72,128]{1,0:T(1,128)}', space=vmem, size = 0x9000, scoped, tag = 'internal scratch']
  %s0 = inlined_call_operand.vmem [shape: bf16[3,32,72], index: 0, kind: input, shape index: {}]
  %s1 = inlined_call_operand.vmem [shape: bf16[3,72,128], index: 1, kind: input, shape index: {}]
  %s2 = inlined_call_operand.vmem [shape: bf16[32,128], index: 2, kind: output, shape index: {0}]
  %s3 = inlined_call_operand.vmem [shape: f32[1,8,128], index: 3, kind: output, shape index: {1}]
  %4 = xla_tuple %s2, %s3
  %s5 = sld [smem:[#allocation0]]
  $region26: #{basic_conv2d.1} parent=0
    _
  %s7 = ssub.s32 1, %s5
  %s8 = scalar_select 0, %s7, %s5
  // Predicated region
  $region2: #{basic_conv2d.1} parent=0 // pred_check
    _
  $region3: #{basic_conv2d.1} parent=0 // pred_check_branch
    %10 = sbr.rel (0) target = $region5
  $region4: #{basic_conv2d.1} parent=0 // pred_region
    _
  $region5: #{basic_conv2d.1} parent=0 // pred_fallthru
    _
  // Predicated region
  $region6: #{basic_conv2d.1} parent=0 // pred_check
    _
  $region7: #{basic_conv2d.1} parent=0 // pred_check_branch
    %12 = sbr.rel (0) target = $region9
  $region8: #{basic_conv2d.1} parent=0 // pred_region
    _
  $region9: #{basic_conv2d.1} parent=0 // pred_fallthru
    _
  %v14 = vld [vmem:[%s0] sm:$0xf]
  %v15 = vld [vmem:[%s0 + $0x4] sm:$0xf]
  %v16 = vld [vmem:[%s0 + $0x8] sm:$0xf]
  %v17 = vld [vmem:[%s0 + $0xc] sm:$0xf]
  %v18 = vld [vmem:[%s1] sm:$0xf]
  %v19 = vld [vmem:[%s1 + $0x4] sm:$0xf]
  %v20 = vld [vmem:[%s1 + $0x8] sm:$0xf]
  %v21 = vld [vmem:[%s1 + $0xc] sm:$0xf]
  %v22 = vld [vmem:[%s1 + $0x10] sm:$0xf]
  %v23 = vld [vmem:[%s1 + $0x14] sm:$0xf]
  %v24 = vld [vmem:[%s1 + $0x18] sm:$0xf]
  %v25 = vld [vmem:[%s1 + $0x1c] sm:$0xf]
  %v26 = vld [vmem:[%s1 + $0x20] sm:$0xf]
  %s27 = scalar_lea.vmem %s0, 16
  %v28 = vld [vmem:[%s27] sm:$0xf]
  %v29 = vld [vmem:[%s27 + $0x4] sm:$0xf]
  %v30 = vld [vmem:[%s27 + $0x8] sm:$0xf]
  %v31 = vld [vmem:[%s27 + $0xc] sm:$0xf]
  %s32 = scalar_lea.vmem %s1, 36
  %v33 = vld [vmem:[%s32] sm:$0xf]
  %v34 = vld [vmem:[%s32 + $0x4] sm:$0xf]
  %v35 = vld [vmem:[%s32 + $0x8] sm:$0xf]
  %v36 = vld [vmem:[%s32 + $0xc] sm:$0xf]
  %v37 = vld [vmem:[%s32 + $0x10] sm:$0xf]
  %v38 = vld [vmem:[%s32 + $0x14] sm:$0xf]
  %v39 = vld [vmem:[%s32 + $0x18] sm:$0xf]
  %v40 = vld [vmem:[%s32 + $0x1c] sm:$0xf]
  %v41 = vld [vmem:[%s32 + $0x20] sm:$0xf]
  %v46 = vunpack.c.l.b16 %v28
  %v47 = vunpack.c.l.b16 %v29
  %v48 = vunpack.c.l.b16 %v30
  %v49 = vunpack.c.l.b16 %v31
  %v50 = vpack.c.b16 %v47, %v46
  %v51 = vpack.c.b16 %v49, %v48
  %v61 = vunpack.c.l.b16 %v33
  %v62 = vunpack.c.l.b16 %v34
  %v63 = vunpack.c.l.b16 %v35
  %v64 = vunpack.c.l.b16 %v36
  %v65 = vunpack.c.l.b16 %v37
  %v66 = vunpack.c.l.b16 %v38
  %v67 = vunpack.c.l.b16 %v39
  %v68 = vunpack.c.l.b16 %v40
  %v69 = vunpack.c.l.b16 %v41
  %v70 = vpack.c.b16 %v62, %v61
  %v71 = vpack.c.b16 %v64, %v63
  %v72 = vpack.c.b16 %v66, %v65
  %v73 = vpack.c.b16 %v68, %v67
  %v74 = vpack.c.b16 %v69, %v69
  %vm79 = vcmask 588800
  %v81 = vsel %vm79, %v50, 0
  %v84 = vsel %vm79, %v51, 0
  %vm86 = vcmask 1043456
  %v88 = vsel %vm86, %v74, 0
  %90 = vmatpush.bf16.msra.mxu0 0
  %91 = vmatpush.bf16.msra.mxu0 0
  %92 = vmatpush.bf16.msra.mxu0 0
  %93 = vmatpush.bf16.msra.mxu0 %v88
  %94 = vmatpush.bf16.msra.mxu0 %v73
  %95 = vmatpush.bf16.msra.mxu0 %v72
  %96 = vmatpush.bf16.msra.mxu0 %v71
  %97 = vmatpush.bf16.msra.mxu0 %v70
  %98 = vmatmul.bf16.gmra.mxu0 %v81
  %v99 = vpop.f32.mrf.mxu0
  %v100 = vadd.f32 0.0, %v99
  %v101 = vpop.f32.mrf.mxu0
  %v102 = vadd.f32 0.0, %v101
  %103 = vmatmul.bf16.gmra.mxu0 %v84
  %v104 = vpop.f32.mrf.mxu0
  %v105 = vadd.f32 0.0, %v104
  %v106 = vpop.f32.mrf.mxu0
  %v107 = vadd.f32 0.0, %v106
  %108 = vdwg.mxu0
  %v113 = vunpack.c.l.b16 %v14
  %v114 = vunpack.c.l.b16 %v15
  %v115 = vunpack.c.l.b16 %v16
  %v116 = vunpack.c.l.b16 %v17
  %v117 = vpack.c.b16 %v114, %v113
  %v118 = vpack.c.b16 %v116, %v115
  %v128 = vunpack.c.l.b16 %v18
  %v129 = vunpack.c.l.b16 %v19
  %v130 = vunpack.c.l.b16 %v20
  %v131 = vunpack.c.l.b16 %v21
  %v132 = vunpack.c.l.b16 %v22
  %v133 = vunpack.c.l.b16 %v23
  %v134 = vunpack.c.l.b16 %v24
  %v135 = vunpack.c.l.b16 %v25
  %v136 = vunpack.c.l.b16 %v26
  %v137 = vpack.c.b16 %v129, %v128
  %v138 = vpack.c.b16 %v131, %v130
  %v139 = vpack.c.b16 %v133, %v132
  %v140 = vpack.c.b16 %v135, %v134
  %v141 = vpack.c.b16 %v136, %v136
  %v147 = vsel %vm79, %v117, 0
  %v150 = vsel %vm79, %v118, 0
  %v153 = vsel %vm86, %v141, 0
  %155 = vmatpush.bf16.msra.mxu0 0
  %156 = vmatpush.bf16.msra.mxu0 0
  %157 = vmatpush.bf16.msra.mxu0 0
  %158 = vmatpush.bf16.msra.mxu0 %v153
  %159 = vmatpush.bf16.msra.mxu0 %v140
  %160 = vmatpush.bf16.msra.mxu0 %v139
  %161 = vmatpush.bf16.msra.mxu0 %v138
  %162 = vmatpush.bf16.msra.mxu0 %v137
  %163 = vmatmul.bf16.gmra.mxu0 %v147
  %v164 = vpop.f32.mrf.mxu0
  %v165 = vadd.f32 %v100, %v164
  %v166 = vpop.f32.mrf.mxu0
  %v167 = vadd.f32 %v102, %v166
  %168 = vmatmul.bf16.gmra.mxu0 %v150
  %v169 = vpop.f32.mrf.mxu0
  %v170 = vadd.f32 %v105, %v169
  %v171 = vpop.f32.mrf.mxu0
  %v172 = vadd.f32 %v107, %v171
  %173 = vdwg.mxu0
  %s174 = scalar_lea.vmem %s0, 32
  %v175 = vld [vmem:[%s174] sm:$0xf]
  %v176 = vld [vmem:[%s174 + $0x4] sm:$0xf]
  %v177 = vld [vmem:[%s174 + $0x8] sm:$0xf]
  %v178 = vld [vmem:[%s174 + $0xc] sm:$0xf]
  %s179 = scalar_lea.vmem %s1, 72
  %v180 = vld [vmem:[%s179] sm:$0xf]
  %v181 = vld [vmem:[%s179 + $0x4] sm:$0xf]
  %v182 = vld [vmem:[%s179 + $0x8] sm:$0xf]
  %v183 = vld [vmem:[%s179 + $0xc] sm:$0xf]
  %v184 = vld [vmem:[%s179 + $0x10] sm:$0xf]
  %v185 = vld [vmem:[%s179 + $0x14] sm:$0xf]
  %v186 = vld [vmem:[%s179 + $0x18] sm:$0xf]
  %v187 = vld [vmem:[%s179 + $0x1c] sm:$0xf]
  %v188 = vld [vmem:[%s179 + $0x20] sm:$0xf]
  %v193 = vunpack.c.l.b16 %v175
  %v194 = vunpack.c.l.b16 %v176
  %v195 = vunpack.c.l.b16 %v177
  %v196 = vunpack.c.l.b16 %v178
  %v197 = vpack.c.b16 %v194, %v193
  %v198 = vpack.c.b16 %v196, %v195
  %v208 = vunpack.c.l.b16 %v180
  %v209 = vunpack.c.l.b16 %v181
  %v210 = vunpack.c.l.b16 %v182
  %v211 = vunpack.c.l.b16 %v183
  %v212 = vunpack.c.l.b16 %v184
  %v213 = vunpack.c.l.b16 %v185
  %v214 = vunpack.c.l.b16 %v186
  %v215 = vunpack.c.l.b16 %v187
  %v216 = vunpack.c.l.b16 %v188
  %v217 = vpack.c.b16 %v209, %v208
  %v218 = vpack.c.b16 %v211, %v210
  %v219 = vpack.c.b16 %v213, %v212
  %v220 = vpack.c.b16 %v215, %v214
  %v221 = vpack.c.b16 %v216, %v216
  %v227 = vsel %vm79, %v197, 0
  %v230 = vsel %vm79, %v198, 0
  %v233 = vsel %vm86, %v221, 0
  %235 = vmatpush.bf16.msra.mxu0 0
  %236 = vmatpush.bf16.msra.mxu0 0
  %237 = vmatpush.bf16.msra.mxu0 0
  %238 = vmatpush.bf16.msra.mxu0 %v233
  %239 = vmatpush.bf16.msra.mxu0 %v220
  %240 = vmatpush.bf16.msra.mxu0 %v219
  %241 = vmatpush.bf16.msra.mxu0 %v218
  %242 = vmatpush.bf16.msra.mxu0 %v217
  %243 = vmatmul.bf16.gmra.mxu0 %v227
  %v244 = vpop.f32.mrf.mxu0
  %v245 = vadd.f32 0.0, %v244
  %v246 = vpop.f32.mrf.mxu0
  %v247 = vadd.f32 0.0, %v246
  %248 = vmatmul.bf16.gmra.mxu0 %v230
  %v249 = vpop.f32.mrf.mxu0
  %v250 = vadd.f32 0.0, %v249
  %v251 = vpop.f32.mrf.mxu0
  %v252 = vadd.f32 0.0, %v251
  %253 = vdwg.mxu0
  %v254 = vadd.f32 %v165, %v245
  %v255 = vadd.f32 %v167, %v247
  %v256 = vadd.f32 %v170, %v250
  %v257 = vadd.f32 %v172, %v252
  %v258 = vmax.f32 %v254, 0.0
  %v259 = vmax.f32 %v255, 0.0
  %v260 = vmax.f32 %v256, 0.0
  %v261 = vmax.f32 %v257, 0.0
  %v262 = vpack.c.bf16 %v258, %v258
  %v263 = vpack.c.bf16 %v259, %v259
  %v264 = vpack.c.bf16 %v260, %v260
  %v265 = vpack.c.bf16 %v261, %v261
  %266 = vst [vmem:[%s2] sm:$0xf] %v262
  %267 = vst [vmem:[%s2 + $0x4] sm:$0xf] %v263
  %268 = vst [vmem:[%s2 + $0x8] sm:$0xf] %v264
  %269 = vst [vmem:[%s2 + $0xc] sm:$0xf] %v265
  %v270 = vadd.f32 %v258, %v259
  %v271 = vadd.f32 %v270, %v260
  %v272 = vadd.f32 %v271, %v261
  %v273 = vrot.slane %v272, 4
  %v274 = vadd.f32 %v272, %v273
  %v275 = vrot.slane %v274, 2
  %v276 = vadd.f32 %v274, %v275
  %v277 = vrot.slane %v276, 1
  %v278 = vadd.f32 %v276, %v277
  %v279 = vmul.f32 %v258, %v258
  %v280 = vmul.f32 %v259, %v259
  %v281 = vmul.f32 %v260, %v260
  %v282 = vmul.f32 %v261, %v261
  %v283 = vadd.f32 %v279, %v280
  %v284 = vadd.f32 %v283, %v281
  %v285 = vadd.f32 %v284, %v282
  %v286 = vrot.slane %v285, 4
  %v287 = vadd.f32 %v285, %v286
  %v288 = vrot.slane %v287, 2
  %v289 = vadd.f32 %v287, %v288
  %v290 = vrot.slane %v289, 1
  %v291 = vadd.f32 %v289, %v290
  %vm292 = vcmask 1040384
  %v293 = vsel %vm292, %v278, %v291
  %vm294 = vcmask 1041408
  %v295 = vsel %vm294, %v293, 0.0
  %296 = vst [vmem:[%s3] sm:$0xff] %v295
  // Predicated region
  $region10: #{basic_conv2d.1} parent=0 // pred_check
    _
  $region11: #{basic_conv2d.1} parent=0 // pred_check_branch
    %298 = sbr.rel (0) target = $region13
  $region12: #{basic_conv2d.1} parent=0 // pred_region
    _
  $region13: #{basic_conv2d.1} parent=0 // pred_fallthru
    _
  // Predicated region
  $region14: #{basic_conv2d.1} parent=0 // pred_check
    _
  $region15: #{basic_conv2d.1} parent=0 // pred_check_branch
    %300 = sbr.rel (0) target = $region17
  $region16: #{basic_conv2d.1} parent=0 // pred_region
    _
  $region17: #{basic_conv2d.1} parent=0 // pred_fallthru
    _
  // Predicated region
  $region18: #{basic_conv2d.1} parent=0 // pred_check
    _
  $region19: #{basic_conv2d.1} parent=0 // pred_check_branch
    %302 = sbr.rel (0) target = $region21
  $region20: #{basic_conv2d.1} parent=0 // pred_region
    _
  $region21: #{basic_conv2d.1} parent=0 // pred_fallthru
    _
  // Predicated region
  $region22: #{basic_conv2d.1} parent=0 // pred_check
    _
  $region23: #{basic_conv2d.1} parent=0 // pred_check_branch
    %304 = sbr.rel (0) target = $region25
  $region24: #{basic_conv2d.1} parent=0 // pred_region
    _
  $region25: #{basic_conv2d.1} parent=0 // pred_fallthru
    _

</llo_original>
